<compile_context>
chip_gen: v7x
topology: tpu7x:2x2x1
jax: 0.10.0
libtpu: 0.0.40
codegen_flags: <defaults>
</compile_context>

<pallas_src>
import functools

import jax
import jax.numpy as jnp
from jax.experimental import pallas as pl
from jax.experimental.pallas import tpu as pltpu


def _patch_embed_kernel(x_ref, w_ref, b_ref, o_ref):
    # Native-dtype MXU operands, f32 accumulation, bias add in f32, one cast on store.
    acc = jnp.dot(x_ref[...], w_ref[...], preferred_element_type=jnp.float32)
    acc = acc + b_ref[...].astype(jnp.float32)
    o_ref[...] = acc.astype(o_ref.dtype)


def _round_up(x, m):
    return ((x + m - 1) // m) * m


@functools.partial(jax.jit, static_argnames=("patch_size", "tm"))
def patch_embed_pallas(x, weight, bias, *, patch_size, tm=256):
    """x: (B, C, H, W), weight: (E, C, P, P), bias: (E,). Returns (B, Np, E)."""
    B, C, H, W = x.shape
    E = weight.shape[0]
    P = patch_size
    gh, gw = H // P, W // P
    num_patches = gh * gw
    M, K = B * num_patches, C * P * P

    # ---- layout plumbing (outside the kernel) ----
    # (B,C,H,W) -> (B, gh, gw, C, P, P) -> (M, K); patch-vector order (c, ph, pw)
    # matches weight.reshape(E, C*P*P), i.e. exactly the conv's dot product.
    patches = x.reshape(B, C, gh, P, gw, P).transpose(0, 2, 4, 1, 3, 5).reshape(M, K)
    w2 = weight.reshape(E, K).T          # (K, E)
    b2 = bias.reshape(1, E)

    # M-tile: as big as possible for MXU rows, but never bigger than (8-aligned) M.
    # Pad the ragged remainder with zeros instead of dropping it.
    tm_eff = min(_round_up(tm, 8), _round_up(M, 8))
    Mp = _round_up(M, tm_eff)
    if Mp != M:
        patches = jnp.pad(patches, ((0, Mp - M), (0, 0)))
    grid = (Mp // tm_eff,)

    # Explicit VMEM budget: double-buffered x/out tiles + resident W/bias (2 bufs)
    # + f32 accumulator, with headroom, clamped to v7x's 64 MiB per-TC VMEM.
    itemsize = jnp.dtype(x.dtype).itemsize
    est = (2 * tm_eff * (K + E) + 2 * (K * E + E)) * itemsize + tm_eff * E * 4
    vmem_limit = int(min(max(4 * est, 8 * 2**20), 64 * 2**20))

    out = pl.pallas_call(
        _patch_embed_kernel,
        out_shape=jax.ShapeDtypeStruct((Mp, E), x.dtype),
        grid_spec=pltpu.PrefetchScalarGridSpec(
            num_scalar_prefetch=0,
            grid=grid,
            in_specs=[
                pl.BlockSpec((tm_eff, K), lambda i: (i, 0)),   # patch row-tile
                pl.BlockSpec((K, E), lambda i: (0, 0)),        # projection weight (resident)
                pl.BlockSpec((1, E), lambda i: (0, 0)),        # bias (resident)
            ],
            out_specs=pl.BlockSpec((tm_eff, E), lambda i: (i, 0)),
        ),
        compiler_params=pltpu.CompilerParams(
            dimension_semantics=("parallel",),
            vmem_limit_bytes=vmem_limit,
        ),
    )(patches, w2, b2)

    return out[:M].reshape(B, num_patches, E)


def _ref_patch_embed(x, weight, bias, patch_size):
    out = jax.lax.conv_general_dilated(
        x, weight,
        window_strides=(patch_size, patch_size),
        padding="VALID",
        dimension_numbers=("NCHW", "OIHW", "NCHW"),
        precision=jax.lax.Precision.HIGHEST,
    )
    out = out + bias.reshape(1, -1, 1, 1)
    B, E, gh, gw = out.shape
    return out.reshape(B, E, gh * gw).transpose(0, 2, 1)


if __name__ == "__main__":
    # Small PatchEmbed: batch=2, in_chans=3, 16x16 image, patch 2 -> 64 tokens, embed 192.
    B, C, IMG, P, E = 2, 3, 16, 2, 192

    key = jax.random.PRNGKey(0)
    kx, kw, kb = jax.random.split(key, 3)
    x = jax.random.normal(kx, (B, C, IMG, IMG), dtype=jnp.float32)
    weight = jax.random.normal(kw, (E, C, P, P), dtype=jnp.float32) * 0.02
    bias = jax.random.normal(kb, (E,), dtype=jnp.float32) * 0.01

    out = patch_embed_pallas(x, weight, bias, patch_size=P)
    jax.block_until_ready(out)

    ref = _ref_patch_embed(x, weight, bias, P)
    Np = (IMG // P) ** 2
    assert out.shape == (B, Np, E)
    assert jnp.allclose(out, ref, atol=1e-3, rtol=1e-3)

    print("KERNEL_OK")
</pallas_src>

<mosaic_0001>
module attributes {stable_mosaic.version = 11 : i64} {
  func.func @_patch_embed_kernel(%arg0: i32, %arg1: memref<128x12xf32, #tpu.memory_space<vmem>>, %arg2: memref<12x192xf32, #tpu.memory_space<vmem>>, %arg3: memref<1x192xf32, #tpu.memory_space<vmem>>, %arg4: memref<128x192xf32, #tpu.memory_space<vmem>>) attributes {dimension_semantics = [#tpu.dimension_semantics<parallel>], iteration_bounds = array<i64: 1>, scalar_prefetch = 0 : i64, scratch_operands = 0 : i64, tpu.core_type = #tpu.core_type<tc>, window_params = [{transform_indices = @transform_0, window_bounds = array<i64: 128, 12>}, {pipeline_mode = #tpu.pipeline_mode<synchronous>, transform_indices = @transform_1, window_bounds = array<i64: 12, 192>}, {pipeline_mode = #tpu.pipeline_mode<synchronous>, transform_indices = @transform_2, window_bounds = array<i64: 1, 192>}, {transform_indices = @transform_3, window_bounds = array<i64: 128, 192>}]} {
    %c0 = arith.constant 0 : index
    %c0_0 = arith.constant 0 : index
    %0 = vector.load %arg1[%c0, %c0_0] : memref<128x12xf32, #tpu.memory_space<vmem>>, vector<128x12xf32>
    %c0_1 = arith.constant 0 : index
    %c0_2 = arith.constant 0 : index
    %1 = vector.load %arg2[%c0_1, %c0_2] : memref<12x192xf32, #tpu.memory_space<vmem>>, vector<12x192xf32>
    %cst = arith.constant dense<0.000000e+00> : vector<128x192xf32>
    %2 = tpu.matmul %0, %1, %cst {dimension_numbers = #tpu.dot_dimension_numbers<[1], [0], [0], [1], [0, 0, 1, 1], [], []>} : vector<128x12xf32>, vector<12x192xf32>, vector<128x192xf32> -> vector<128x192xf32>
    %c0_3 = arith.constant 0 : index
    %c0_4 = arith.constant 0 : index
    %3 = vector.load %arg3[%c0_3, %c0_4] : memref<1x192xf32, #tpu.memory_space<vmem>>, vector<1x192xf32>
    %4 = vector.broadcast %3 : vector<1x192xf32> to vector<128x192xf32>
    %5 = arith.addf %2, %4 : vector<128x192xf32>
    %c0_5 = arith.constant 0 : index
    %c0_6 = arith.constant 0 : index
    %6 = vector.load %arg4[%c0_5, %c0_6] : memref<128x192xf32, #tpu.memory_space<vmem>>, vector<128x192xf32>
    tpu.vector_store %arg4[%c0_5, %c0_6], %5 {strides = array<i32>} : memref<128x192xf32, #tpu.memory_space<vmem>>, vector<128x192xf32>,
    return
  }
  func.func @transform_0(%arg0: i32) -> (i32, i32) {
    %c0_i32 = arith.constant 0 : i32
    %c0_i32_0 = arith.constant 0 : i32
    return %arg0, %c0_i32 : i32, i32
  }
  func.func @transform_1(%arg0: i32) -> (i32, i32) {
    %c0_i32 = arith.constant 0 : i32
    %c0_i32_0 = arith.constant 0 : i32
    %c0_i32_1 = arith.constant 0 : i32
    return %c0_i32, %c0_i32_0 : i32, i32
  }
  func.func @transform_2(%arg0: i32) -> (i32, i32) {
    %c0_i32 = arith.constant 0 : i32
    %c0_i32_0 = arith.constant 0 : i32
    %c0_i32_1 = arith.constant 0 : i32
    return %c0_i32, %c0_i32_0 : i32, i32
  }
  func.func @transform_3(%arg0: i32) -> (i32, i32) {
    %c0_i32 = arith.constant 0 : i32
    %c0_i32_0 = arith.constant 0 : i32
    return %arg0, %c0_i32 : i32, i32
  }
}

</mosaic_0001>

<llo_original>
// kernel: patch_embed_pallas.1
$region0: #{patch_embed_pallas.1}
  #allocation0 [shape = 'u32[]', space=smem, size = 0x4, offset = 0x4, fixed_abs, tag = 'smem constant byte address 0x4 - core index']
  #allocation1 [shape = 'u32[144,128]{1,0:T(1,128)}', space=vmem, size = 0x12000, scoped, tag = 'internal scratch']
  %s0 = inlined_call_operand.vmem [shape: f32[128,12], index: 0, kind: input, shape index: {}]
  %s1 = inlined_call_operand.vmem [shape: f32[12,192], index: 1, kind: input, shape index: {}]
  %s2 = inlined_call_operand.vmem [shape: f32[1,192], index: 2, kind: input, shape index: {}]
  %s3 = inlined_call_operand.hbm [shape: f32[128,192], index: 3, kind: output, shape index: {}]
  %s4 = sld [smem:[#allocation0]]
  $region22: #{patch_embed_pallas.1} parent=0
    _
  %s6 = ssub.s32 1, %s4
  %s7 = scalar_select 0, %s6, %s4
  $region1: #{patch_embed_pallas.1} parent=0
    #allocation2 [shape = 'u8[131072]{0}', space=vmem, size = 0x20000, scoped, tag = 'output window, operand 0, single buffered']
    #allocation3 [shape = 's32[1]{0}', space=sflag, size = 0x4, scoped, tag = 'scoped memory for patch_embed_pallas.1']
    %8 = vsyncpa [#allocation3], 0
    // Predicated region
    $region2: #{patch_embed_pallas.1} parent=1 // pred_check
      _
    $region3: #{patch_embed_pallas.1} parent=1 // pred_check_branch
      %10 = sbr.rel (0) target = $region5
    $region4: #{patch_embed_pallas.1} parent=1 // pred_region
      _
    $region5: #{patch_embed_pallas.1} parent=1 // pred_fallthru
      _
    // Predicated region
    $region6: #{patch_embed_pallas.1} parent=1 // pred_check
      _
    $region7: #{patch_embed_pallas.1} parent=1 // pred_check_branch
      %12 = sbr.rel (0) target = $region9
    $region8: #{patch_embed_pallas.1} parent=1 // pred_region
      _
    $region9: #{patch_embed_pallas.1} parent=1 // pred_fallthru
      _
    // Predicated region
    $region10: #{patch_embed_pallas.1} parent=1 // pred_check
      _
    $region11: #{patch_embed_pallas.1} parent=1 // pred_check_branch
      %14 = sbr.rel (0) target = $region13
    $region12: #{patch_embed_pallas.1} parent=1 // pred_region
      _
    $region13: #{patch_embed_pallas.1} parent=1 // pred_fallthru
      _
    %v15 = vld [vmem:[%s0] sm:$0xff]
    %v16 = vld [vmem:[%s0 + $0x8] sm:$0xff]
    %v17 = vld [vmem:[%s0 + $0x10] sm:$0xff]
    %v18 = vld [vmem:[%s0 + $0x18] sm:$0xff]
    %v19 = vld [vmem:[%s0 + $0x20] sm:$0xff]
    %v20 = vld [vmem:[%s0 + $0x28] sm:$0xff]
    %v21 = vld [vmem:[%s0 + $0x30] sm:$0xff]
    %v22 = vld [vmem:[%s0 + $0x38] sm:$0xff]
    %v23 = vld [vmem:[%s0 + $0x40] sm:$0xff]
    %v24 = vld [vmem:[%s0 + $0x48] sm:$0xff]
    %v25 = vld [vmem:[%s0 + $0x50] sm:$0xff]
    %v26 = vld [vmem:[%s0 + $0x58] sm:$0xff]
    %v27 = vld [vmem:[%s0 + $0x60] sm:$0xff]
    %v28 = vld [vmem:[%s0 + $0x68] sm:$0xff]
    %v29 = vld [vmem:[%s0 + $0x70] sm:$0xff]
    %v30 = vld [vmem:[%s0 + $0x78] sm:$0xff]
    %v31 = vld [vmem:[%s1] sm:$0xff]
    %v32 = vld [vmem:[%s1 + $0x8] sm:$0xff]
    %v33 = vld [vmem:[%s1 + $0x10] sm:$0xf]
    %v34 = vld [vmem:[%s1 + $0x18] sm:$0xf]
    %v35 = vld [vmem:[%s2] sm:$0x3]
    %v37 = vlaneseq
    %v38 = vshrl.u32 %v37, 7
    %v39 = vsub.s32 0, %v38
    %v40 = vrot.slane %v35, %v39
    %v41 = vlaneseq
    %v42 = vshrl.u32 %v41, 7
    %v43 = vsub.s32 1, %v42
    %v44 = vrot.slane %v35, %v43
    %vm47 = vcmask 97280
    %v49 = vsel %vm47, %v15, 0
    %v52 = vsel %vm47, %v16, 0
    %v55 = vsel %vm47, %v17, 0
    %v58 = vsel %vm47, %v18, 0
    %v61 = vsel %vm47, %v19, 0
    %v64 = vsel %vm47, %v20, 0
    %v67 = vsel %vm47, %v21, 0
    %v70 = vsel %vm47, %v22, 0
    %v73 = vsel %vm47, %v23, 0
    %v76 = vsel %vm47, %v24, 0
    %v79 = vsel %vm47, %v25, 0
    %v82 = vsel %vm47, %v26, 0
    %v85 = vsel %vm47, %v27, 0
    %v88 = vsel %vm47, %v28, 0
    %v91 = vsel %vm47, %v29, 0
    %v94 = vsel %vm47, %v30, 0
    %vm96 = vcmask 1043456
    %v98 = vsel %vm96, %v33, 0
    %v101 = vsel %vm96, %v34, 0
    %103 = vmatprep.subr.mxu0 %v32
    %104 = vmatpush1.msra.mxu0 %v31
    %105 = vmatprep.subr.mxu0 %v101
    %106 = vmatpush1.msra.mxu0 %v98
    %107 = vmatprep.subr.mxu0 0.0
    %108 = vmatpush1.msra.mxu0 0.0
    %109 = vmatprep.subr.mxu0 0.0
    %110 = vmatpush1.msra.mxu0 0.0
    %111 = vmatprep.subr.mxu0 0.0
    %112 = vmatpush1.msra.mxu0 0.0
    %113 = vmatprep.subr.mxu0 0.0
    %114 = vmatpush1.msra.mxu0 0.0
    %115 = vmatprep.subr.mxu0 0.0
    %116 = vmatpush1.msra.mxu0 0.0
    %117 = vmatprep.subr.mxu0 0.0
    %118 = vmatpush1.msra.mxu0 0.0
    %119 = vmatprep.subr.mxu0 0.0
    %120 = vmatpush1.msra.mxu0 0.0
    %121 = vmatprep.subr.mxu0 0.0
    %122 = vmatpush1.msra.mxu0 0.0
    %123 = vmatprep.subr.mxu0 0.0
    %124 = vmatpush1.msra.mxu0 0.0
    %125 = vmatprep.subr.mxu0 0.0
    %126 = vmatpush1.msra.mxu0 0.0
    %127 = vmatprep.subr.mxu0 0.0
    %128 = vmatpush1.msra.mxu0 0.0
    %129 = vmatprep.subr.mxu0 0.0
    %130 = vmatpush1.msra.mxu0 0.0
    %131 = vmatprep.subr.mxu0 0.0
    %132 = vmatpush1.msra.mxu0 0.0
    %133 = vmatprep.subr.mxu0 0.0
    %134 = vmatpush1.msra.mxu0 0.0
    %135 = vmatprep.subr.mxu0 0.0
    %136 = vmatpush1.msra.mxu0 0.0
    %137 = vmatprep.subr.mxu0 0.0
    %138 = vmatpush1.msra.mxu0 0.0
    %139 = vmatprep.subr.mxu0 0.0
    %140 = vmatpush1.msra.mxu0 0.0
    %141 = vmatprep.subr.mxu0 0.0
    %142 = vmatpush1.msra.mxu0 0.0
    %143 = vmatprep.subr.mxu0 0.0
    %144 = vmatpush1.msra.mxu0 0.0
    %145 = vmatprep.subr.mxu0 0.0
    %146 = vmatpush1.msra.mxu0 0.0
    %147 = vmatprep.subr.mxu0 0.0
    %148 = vmatpush1.msra.mxu0 0.0
    %149 = vmatprep.subr.mxu0 0.0
    %150 = vmatpush1.msra.mxu0 0.0
    %151 = vmatprep.subr.mxu0 0.0
    %152 = vmatpush1.msra.mxu0 0.0
    %153 = vmatprep.subr.mxu0 0.0
    %154 = vmatpush1.msra.mxu0 0.0
    %155 = vmatprep.subr.mxu0 0.0
    %156 = vmatpush1.msra.mxu0 0.0
    %157 = vmatprep.subr.mxu0 0.0
    %158 = vmatpush1.msra.mxu0 0.0
    %159 = vmatprep.subr.mxu0 0.0
    %160 = vmatpush1.msra.mxu0 0.0
    %161 = vmatprep.subr.mxu0 0.0
    %162 = vmatpush1.msra.mxu0 0.0
    %163 = vmatprep.subr.mxu0 0.0
    %164 = vmatpush1.msra.mxu0 0.0
    %165 = vmatprep.subr.mxu0 0.0
    %166 = vmatpush1.msra.mxu0 0.0
    %167 = vmatprep.mubr.f32.mxu0 0.0
    %168 = vmatmul.mubr.f32.gmra.mrb[0].mxu0 %v49
    %v169 = vpop.f32.mrb[0].mxu0
    %v170 = vadd.f32 %v40, %v169
    %v171 = vpop.f32.mrb[0].mxu0
    %v172 = vadd.f32 %v44, %v171
    %173 = vmatprep.mubr.f32.mxu0 0.0
    %174 = vmatmul.mubr.f32.gmra.mrb[0].mxu0 %v52
    %v175 = vpop.f32.mrb[0].mxu0
    %v176 = vadd.f32 %v40, %v175
    %v177 = vpop.f32.mrb[0].mxu0
    %v178 = vadd.f32 %v44, %v177
    %179 = vmatprep.mubr.f32.mxu0 0.0
    %180 = vmatmul.mubr.f32.gmra.mrb[0].mxu0 %v55
    %v181 = vpop.f32.mrb[0].mxu0
    %v182 = vadd.f32 %v40, %v181
    %v183 = vpop.f32.mrb[0].mxu0
    %v184 = vadd.f32 %v44, %v183
    %185 = vmatprep.mubr.f32.mxu0 0.0
    %186 = vmatmul.mubr.f32.gmra.mrb[0].mxu0 %v58
    %v187 = vpop.f32.mrb[0].mxu0
    %v188 = vadd.f32 %v40, %v187
    %v189 = vpop.f32.mrb[0].mxu0
    %v190 = vadd.f32 %v44, %v189
    %191 = vmatprep.mubr.f32.mxu0 0.0
    %192 = vmatmul.mubr.f32.gmra.mrb[0].mxu0 %v61
    %v193 = vpop.f32.mrb[0].mxu0
    %v194 = vadd.f32 %v40, %v193
    %v195 = vpop.f32.mrb[0].mxu0
    %v196 = vadd.f32 %v44, %v195
    %197 = vmatprep.mubr.f32.mxu0 0.0
    %198 = vmatmul.mubr.f32.gmra.mrb[0].mxu0 %v64
    %v199 = vpop.f32.mrb[0].mxu0
    %v200 = vadd.f32 %v40, %v199
    %v201 = vpop.f32.mrb[0].mxu0
    %v202 = vadd.f32 %v44, %v201
    %203 = vmatprep.mubr.f32.mxu0 0.0
    %204 = vmatmul.mubr.f32.gmra.mrb[0].mxu0 %v67
    %v205 = vpop.f32.mrb[0].mxu0
    %v206 = vadd.f32 %v40, %v205
    %v207 = vpop.f32.mrb[0].mxu0
    %v208 = vadd.f32 %v44, %v207
    %209 = vmatprep.mubr.f32.mxu0 0.0
    %210 = vmatmul.mubr.f32.gmra.mrb[0].mxu0 %v70
    %v211 = vpop.f32.mrb[0].mxu0
    %v212 = vadd.f32 %v40, %v211
    %v213 = vpop.f32.mrb[0].mxu0
    %v214 = vadd.f32 %v44, %v213
    %215 = vmatprep.mubr.f32.mxu0 0.0
    %216 = vmatmul.mubr.f32.gmra.mrb[0].mxu0 %v73
    %v217 = vpop.f32.mrb[0].mxu0
    %v218 = vadd.f32 %v40, %v217
    %v219 = vpop.f32.mrb[0].mxu0
    %v220 = vadd.f32 %v44, %v219
    %221 = vmatprep.mubr.f32.mxu0 0.0
    %222 = vmatmul.mubr.f32.gmra.mrb[0].mxu0 %v76
    %v223 = vpop.f32.mrb[0].mxu0
    %v224 = vadd.f32 %v40, %v223
    %v225 = vpop.f32.mrb[0].mxu0
    %v226 = vadd.f32 %v44, %v225
    %227 = vmatprep.mubr.f32.mxu0 0.0
    %228 = vmatmul.mubr.f32.gmra.mrb[0].mxu0 %v79
    %v229 = vpop.f32.mrb[0].mxu0
    %v230 = vadd.f32 %v40, %v229
    %v231 = vpop.f32.mrb[0].mxu0
    %v232 = vadd.f32 %v44, %v231
    %233 = vmatprep.mubr.f32.mxu0 0.0
    %234 = vmatmul.mubr.f32.gmra.mrb[0].mxu0 %v82
    %v235 = vpop.f32.mrb[0].mxu0
    %v236 = vadd.f32 %v40, %v235
    %v237 = vpop.f32.mrb[0].mxu0
    %v238 = vadd.f32 %v44, %v237
    %239 = vmatprep.mubr.f32.mxu0 0.0
    %240 = vmatmul.mubr.f32.gmra.mrb[0].mxu0 %v85
    %v241 = vpop.f32.mrb[0].mxu0
    %v242 = vadd.f32 %v40, %v241
    %v243 = vpop.f32.mrb[0].mxu0
    %v244 = vadd.f32 %v44, %v243
    %245 = vmatprep.mubr.f32.mxu0 0.0
    %246 = vmatmul.mubr.f32.gmra.mrb[0].mxu0 %v88
    %v247 = vpop.f32.mrb[0].mxu0
    %v248 = vadd.f32 %v40, %v247
    %v249 = vpop.f32.mrb[0].mxu0
    %v250 = vadd.f32 %v44, %v249
    %251 = vmatprep.mubr.f32.mxu0 0.0
    %252 = vmatmul.mubr.f32.gmra.mrb[0].mxu0 %v91
    %v253 = vpop.f32.mrb[0].mxu0
    %v254 = vadd.f32 %v40, %v253
    %v255 = vpop.f32.mrb[0].mxu0
    %v256 = vadd.f32 %v44, %v255
    %257 = vmatprep.mubr.f32.mxu0 0.0
    %258 = vmatmul.mubr.f32.gmra.mrb[0].mxu0 %v94
    %v259 = vpop.f32.mrb[0].mxu0
    %v260 = vadd.f32 %v40, %v259
    %v261 = vpop.f32.mrb[0].mxu0
    %v262 = vadd.f32 %v44, %v261
    %263 = vdwg.mxu0
    %264 = vst [vmem:[#allocation2] sm:$0xff] %v170
    %vm265 = vcmask 523264
    %266 = vst.msk [vmem:[#allocation2 + $0x8] sm:$0xff] %vm265, %v172
    %267 = vst [vmem:[#allocation2 + $0x10] sm:$0xff] %v176
    %268 = vst.msk [vmem:[#allocation2 + $0x18] sm:$0xff] %vm265, %v178
    %269 = vst [vmem:[#allocation2 + $0x20] sm:$0xff] %v182
    %270 = vst.msk [vmem:[#allocation2 + $0x28] sm:$0xff] %vm265, %v184
    %271 = vst [vmem:[#allocation2 + $0x30] sm:$0xff] %v188
    %272 = vst.msk [vmem:[#allocation2 + $0x38] sm:$0xff] %vm265, %v190
    %273 = vst [vmem:[#allocation2 + $0x40] sm:$0xff] %v194
    %274 = vst.msk [vmem:[#allocation2 + $0x48] sm:$0xff] %vm265, %v196
    %275 = vst [vmem:[#allocation2 + $0x50] sm:$0xff] %v200
    %276 = vst.msk [vmem:[#allocation2 + $0x58] sm:$0xff] %vm265, %v202
    %277 = vst [vmem:[#allocation2 + $0x60] sm:$0xff] %v206
    %278 = vst.msk [vmem:[#allocation2 + $0x68] sm:$0xff] %vm265, %v208
    %279 = vst [vmem:[#allocation2 + $0x70] sm:$0xff] %v212
    %280 = vst.msk [vmem:[#allocation2 + $0x78] sm:$0xff] %vm265, %v214
    %281 = vst [vmem:[#allocation2 + $0x80] sm:$0xff] %v218
    %282 = vst.msk [vmem:[#allocation2 + $0x88] sm:$0xff] %vm265, %v220
    %283 = vst [vmem:[#allocation2 + $0x90] sm:$0xff] %v224
    %284 = vst.msk [vmem:[#allocation2 + $0x98] sm:$0xff] %vm265, %v226
    %285 = vst [vmem:[#allocation2 + $0xa0] sm:$0xff] %v230
    %286 = vst.msk [vmem:[#allocation2 + $0xa8] sm:$0xff] %vm265, %v232
    %287 = vst [vmem:[#allocation2 + $0xb0] sm:$0xff] %v236
    %288 = vst.msk [vmem:[#allocation2 + $0xb8] sm:$0xff] %vm265, %v238
    %289 = vst [vmem:[#allocation2 + $0xc0] sm:$0xff] %v242
    %290 = vst.msk [vmem:[#allocation2 + $0xc8] sm:$0xff] %vm265, %v244
    %291 = vst [vmem:[#allocation2 + $0xd0] sm:$0xff] %v248
    %292 = vst.msk [vmem:[#allocation2 + $0xd8] sm:$0xff] %vm265, %v250
    %293 = vst [vmem:[#allocation2 + $0xe0] sm:$0xff] %v254
    %294 = vst.msk [vmem:[#allocation2 + $0xe8] sm:$0xff] %vm265, %v256
    %295 = vst [vmem:[#allocation2 + $0xf0] sm:$0xff] %v260
    %296 = vst.msk [vmem:[#allocation2 + $0xf8] sm:$0xff] %vm265, %v262
    // Predicated region
    $region14: #{patch_embed_pallas.1} parent=1 // pred_check
      _
    $region15: #{patch_embed_pallas.1} parent=1 // pred_check_branch
      %298 = sbr.rel (0) target = $region17
    $region16: #{patch_embed_pallas.1} parent=1 // pred_region
      %s300 = ssub.s32 4096, 4096
      %301 = vsyncadd [#allocation3], %s300
      %s302 = sshll.u32 [#allocation2], 4
      %s303 = int_to_ptr.vmem [resolvable:$true] %s302
      %308 = dma.vmem_to_hbm [thread:$0]  %s303, 4096, %s3, [#allocation3], 256, 256, 16
    $region17: #{patch_embed_pallas.1} parent=1 // pred_fallthru
      _
    // Predicated region
    $region18: #{patch_embed_pallas.1} parent=1 // pred_check
      _
    $region19: #{patch_embed_pallas.1} parent=1 // pred_check_branch
      %310 = sbr.rel (0) target = $region21
    $region20: #{patch_embed_pallas.1} parent=1 // pred_region
      %311 = dma.done [#allocation3], 4096
    $region21: #{patch_embed_pallas.1} parent=1 // pred_fallthru
      _
    %312 = vsyncpa [#allocation3], 1

</llo_original>
